<compile_context>
chip_gen: v7x
topology: tpu7x:2x2x1
jax: 0.10.0
libtpu: 0.0.40
codegen_flags: <defaults>
</compile_context>

<pallas_src>
import functools
import math

import jax
import jax.numpy as jnp
from jax.experimental import pallas as pl
from jax.experimental.pallas import tpu as pltpu


NEG_BIG = -1e30                 # finite "minus infinity": masked rows stay NaN-free
_VMEM_LIMIT = 64 * 1024 * 1024  # explicit scoped-VMEM limit (v5e default is only 16 MiB)


def _row_tile(m):
    """Largest row tile from a pipelining-friendly ladder that divides m.

    Linear/out kernels are HBM-bound: bigger row tiles get closer to the HBM
    roofline (1024 is comfortable on v5e/v6e 128 MiB VMEM and still fine on
    v7x's 64 MiB at typical d_model).
    """
    for c in (1024, 512, 256, 128, 64, 32, 16, 8):
        if m % c == 0:
            return c
    return m


def _seq_tile(length):
    """Query-sequence tile; prefers multiples of 256 for the 256-wide MXU."""
    if length <= 256:
        return length
    for c in (256, 512, 128, 64):
        if length % c == 0:
            return c
    return length


# ----------------------------- Pallas kernels ------------------------------ #

def proj_kernel(x_ref, w_ref, b_ref, o_ref):
    """One head's linear projection for one row tile: o[h] = x @ W[h] + b[h].

    x: (tm, d_model) bf16   w: (1, d_model, d) bf16   b: (1, 1, d) f32
    o: (1, tm, d) bf16      (head-major output)
    """
    acc = jnp.dot(x_ref[...], w_ref[0], preferred_element_type=jnp.float32)
    o_ref[0] = (acc + b_ref[0]).astype(o_ref.dtype)


def attn_kernel(q_ref, k_ref, v_ref, m_ref, o_ref, *a_refs):
    """Scaled-dot-product attention for one (batch, head, q-tile) grid step.

    q: (1, 1, tq, d_k) bf16   k: (1, 1, Lk, d_k) bf16   v: (1, 1, Lk, d_v) bf16
    m: (1, tq, Lk) int8 (1 = masked)
    o: (1, 1, tq, d_v) bf16   optional a: (1, 1, tq, Lk) f32 attention probs
    """
    q = q_ref[0, 0]
    k = k_ref[0, 0]
    v = v_ref[0, 0]

    # scores = (q / temperature) @ k^T  (temperature folded into the q proj)
    s = jax.lax.dot_general(q, k, (((1,), (1,)), ((), ())),
                            preferred_element_type=jnp.float32)      # (tq, Lk)
    # Additive mask bias built in-kernel from the int8 mask (VPU filler):
    # 0 where visible, -1e30 where masked (finite stand-in for -inf).
    s = s + m_ref[0].astype(jnp.float32) * jnp.float32(NEG_BIG)

    smax = jnp.max(s, axis=-1, keepdims=True)
    e = jnp.exp(s - smax)
    denom = jnp.sum(e, axis=-1, keepdims=True)
    p = e * pl.reciprocal(denom, approx=True)                        # EUP

    o_ref[0, 0] = jnp.dot(p.astype(jnp.bfloat16), v,
                          preferred_element_type=jnp.float32).astype(o_ref.dtype)
    if a_refs:
        a_refs[0][0, 0] = p


def out_kernel(x_ref, w_ref, b_ref, res_ref, g_ref, beta_ref, o_ref, acc_ref,
               *, eps):
    """fc over heads (grid reduction axis) + residual + LayerNorm, fused.

    x: (1, tm, d_v) bf16 — head h's attention-output rows
    w: (1, d_v, d_model) bf16 — head h's fc weight slice
    acc: (tm, d_model) f32 VMEM scratch accumulator
    """
    h = pl.program_id(1)

    @pl.when(h == 0)
    def _():
        acc_ref[...] = jnp.zeros_like(acc_ref)

    acc_ref[...] += jnp.dot(x_ref[0], w_ref[0],
                            preferred_element_type=jnp.float32)

    @pl.when(h == pl.num_programs(1) - 1)
    def _():
        y = acc_ref[...] + b_ref[...] + res_ref[...]
        mean = jnp.mean(y, axis=-1, keepdims=True)
        var = jnp.mean(jnp.square(y - mean), axis=-1, keepdims=True)
        yn = (y - mean) * jax.lax.rsqrt(var + eps)
        o_ref[...] = yn * g_ref[...] + beta_ref[...]


# ------------------------------ host wrappers ------------------------------ #

def _split_heads(w, n_head):
    """(d_in, H*d) nn.Linear-style weight -> head-major (H, d_in, d)."""
    d_in, hd = w.shape
    d = hd // n_head
    return jnp.transpose(w.reshape(d_in, n_head, d), (1, 0, 2))


def _project(x_bf16, w_heads, b_heads):
    """x (M, d_model) bf16 @ per-head weights -> head-major (H, M, d) bf16."""
    M, d_model = x_bf16.shape
    H, _, d = w_heads.shape
    tm = _row_tile(M)
    return pl.pallas_call(
        proj_kernel,
        out_shape=jax.ShapeDtypeStruct((H, M, d), jnp.bfloat16),
        grid=(pl.cdiv(M, tm), H),
        in_specs=[pl.BlockSpec((tm, d_model), lambda i, h: (i, 0)),
                  pl.BlockSpec((1, d_model, d), lambda i, h: (h, 0, 0)),
                  pl.BlockSpec((1, 1, d), lambda i, h: (h, 0, 0))],
        out_specs=pl.BlockSpec((1, tm, d), lambda i, h: (h, i, 0)),
        compiler_params=pltpu.CompilerParams(
            dimension_semantics=("parallel", "parallel"),
            vmem_limit_bytes=_VMEM_LIMIT),
    )(x_bf16, w_heads, b_heads)


def multi_head_attention(q, k, v, mask, params, *, n_head, d_k, d_v,
                         return_attn=True):
    B, Lq, d_model = q.shape
    _, Lk, _ = k.shape
    _, Lv, _ = v.shape
    residual = q

    inv_temp = 1.0 / (float(d_k) ** 0.5)

    # Fold 1/temperature into the Q projection (exact); cast weights to bf16
    # once on the host (full-rate MXU, half the weight DMA bytes).
    w_q = (_split_heads(params["w_qs"], n_head) * inv_temp).astype(jnp.bfloat16)
    b_q = (params["b_qs"] * inv_temp).reshape(n_head, 1, d_k)
    w_k = _split_heads(params["w_ks"], n_head).astype(jnp.bfloat16)
    b_k = params["b_ks"].reshape(n_head, 1, d_k)
    w_v = _split_heads(params["w_vs"], n_head).astype(jnp.bfloat16)
    b_v = params["b_vs"].reshape(n_head, 1, d_v)
    w_fc = params["w_fc"].reshape(n_head, d_v, d_model).astype(jnp.bfloat16)

    # ---- q/k/v projections (row-tiled, head-major bf16 outputs) ----
    # Activations cast to bf16 once here (halves projection activation DMA).
    # TODO(synk): fuse the three projections into one pallas_call when q/k/v
    # are the same tensor (self-attention) so x is read from HBM only once.
    qh = _project(q.reshape(B * Lq, d_model).astype(jnp.bfloat16), w_q, b_q)
    kh = _project(k.reshape(B * Lk, d_model).astype(jnp.bfloat16), w_k, b_k)
    vh = _project(v.reshape(B * Lv, d_model).astype(jnp.bfloat16), w_v, b_v)

    qh = qh.reshape(n_head, B, Lq, d_k)
    kh = kh.reshape(n_head, B, Lk, d_k)
    vh = vh.reshape(n_head, B, Lv, d_v)

    # 1-byte mask instead of a host-materialized f32 bias array.
    mask_i8 = mask.astype(jnp.int8)

    tq = _seq_tile(Lq)
    nq = pl.cdiv(Lq, tq)

    out_shapes = [jax.ShapeDtypeStruct((n_head, B, Lq, d_v), jnp.bfloat16)]
    out_specs = [pl.BlockSpec((1, 1, tq, d_v), lambda b, h, i: (h, b, i, 0))]
    if return_attn:
        # Written contiguously per grid step, already in the torch
        # (n_head*B, Lq, Lk) layout -> no host-side transpose afterwards.
        # TODO(synk): flash-style Lk tiling (online softmax) when the probs
        # output is not needed and Lk is large (v7x 64 MiB VMEM budget).
        out_shapes.append(jax.ShapeDtypeStruct((n_head, B, Lq, Lk), jnp.float32))
        out_specs.append(pl.BlockSpec((1, 1, tq, Lk), lambda b, h, i: (h, b, i, 0)))

    results = pl.pallas_call(
        attn_kernel,
        out_shape=tuple(out_shapes),
        grid=(B, n_head, nq),
        in_specs=[pl.BlockSpec((1, 1, tq, d_k), lambda b, h, i: (h, b, i, 0)),
                  pl.BlockSpec((1, 1, Lk, d_k), lambda b, h, i: (h, b, 0, 0)),
                  pl.BlockSpec((1, 1, Lv, d_v), lambda b, h, i: (h, b, 0, 0)),
                  pl.BlockSpec((1, tq, Lk), lambda b, h, i: (b, i, 0))],
        out_specs=tuple(out_specs),
        compiler_params=pltpu.CompilerParams(
            dimension_semantics=("parallel", "parallel", "parallel"),
            vmem_limit_bytes=_VMEM_LIMIT),
    )(qh, kh, vh, mask_i8)

    o_heads = results[0]                                  # (H, B, Lq, d_v) bf16
    attn = results[1] if return_attn else None

    # ---- fc over heads + residual + LayerNorm (fused, row-tiled) ----
    M = B * Lq
    tm = _row_tile(M)
    y = pl.pallas_call(
        functools.partial(out_kernel, eps=1e-5),
        out_shape=jax.ShapeDtypeStruct((M, d_model), jnp.float32),
        grid=(pl.cdiv(M, tm), n_head),
        in_specs=[pl.BlockSpec((1, tm, d_v), lambda i, h: (h, i, 0)),
                  pl.BlockSpec((1, d_v, d_model), lambda i, h: (h, 0, 0)),
                  pl.BlockSpec((1, d_model), lambda i, h: (0, 0)),
                  pl.BlockSpec((tm, d_model), lambda i, h: (i, 0)),
                  pl.BlockSpec((1, d_model), lambda i, h: (0, 0)),
                  pl.BlockSpec((1, d_model), lambda i, h: (0, 0))],
        out_specs=pl.BlockSpec((tm, d_model), lambda i, h: (i, 0)),
        scratch_shapes=[pltpu.VMEM((tm, d_model), jnp.float32)],
        compiler_params=pltpu.CompilerParams(
            dimension_semantics=("parallel", "arbitrary"),
            vmem_limit_bytes=_VMEM_LIMIT),
    )(o_heads.reshape(n_head, M, d_v),
      w_fc, params["b_fc"].reshape(1, d_model),
      residual.reshape(M, d_model),
      params["ln_gamma"].reshape(1, d_model),
      params["ln_beta"].reshape(1, d_model))

    out = y.reshape(B, Lq, d_model)
    if return_attn:
        # Torch layout: (n_head * B, Lq, Lk), index h * B + b (free reshape).
        return out, attn.reshape(n_head * B, Lq, Lk)
    return out


def init_params(key, n_head, d_model, d_k, d_v):
    ks = jax.random.split(key, 8)
    std_qk = math.sqrt(2.0 / (d_model + d_k))
    std_v = math.sqrt(2.0 / (d_model + d_v))
    std_fc = math.sqrt(2.0 / (n_head * d_v + d_model))  # xavier_normal_
    # Weights stored already transposed relative to nn.Linear: (in, out).
    return {
        "w_qs": std_qk * jax.random.normal(ks[0], (d_model, n_head * d_k), jnp.float32),
        "b_qs": 0.01 * jax.random.normal(ks[1], (n_head * d_k,), jnp.float32),
        "w_ks": std_qk * jax.random.normal(ks[2], (d_model, n_head * d_k), jnp.float32),
        "b_ks": 0.01 * jax.random.normal(ks[3], (n_head * d_k,), jnp.float32),
        "w_vs": std_v * jax.random.normal(ks[4], (d_model, n_head * d_v), jnp.float32),
        "b_vs": 0.01 * jax.random.normal(ks[5], (n_head * d_v,), jnp.float32),
        "w_fc": std_fc * jax.random.normal(ks[6], (n_head * d_v, d_model), jnp.float32),
        "b_fc": 0.01 * jax.random.normal(ks[7], (d_model,), jnp.float32),
        "ln_gamma": jnp.ones((d_model,), jnp.float32),
        "ln_beta": jnp.zeros((d_model,), jnp.float32),
    }


if __name__ == "__main__":
    n_head, d_model, d_k, d_v = 4, 32, 8, 8
    B, L = 2, 8

    key = jax.random.PRNGKey(0)
    kq, kk, kv, kp = jax.random.split(key, 4)
    q = jax.random.normal(kq, (B, L, d_model), jnp.float32)
    k = jax.random.normal(kk, (B, L, d_model), jnp.float32)
    v = jax.random.normal(kv, (B, L, d_model), jnp.float32)

    # Padding-style mask (True = masked). Batch 0: nothing masked; batch 1:
    # last two key positions masked.
    mask = jnp.zeros((B, L, L), dtype=jnp.bool_)
    mask = mask.at[1, :, L - 2:].set(True)

    params = init_params(kp, n_head, d_model, d_k, d_v)

    out, attn = multi_head_attention(q, k, v, mask, params,
                                     n_head=n_head, d_k=d_k, d_v=d_v)
    out = jax.block_until_ready(out)
    attn = jax.block_until_ready(attn)

    assert out.shape == (B, L, d_model)
    assert attn.shape == (n_head * B, L, L)
    assert bool(jnp.all(jnp.isfinite(out)))
    assert bool(jnp.all(jnp.isfinite(attn)))
    print("KERNEL_OK")
</pallas_src>

<mosaic_0001>
module attributes {stable_mosaic.version = 11 : i64} {
  func.func @proj_kernel(%arg0: i32, %arg1: i32, %arg2: memref<16x32xbf16, #tpu.memory_space<vmem>>, %arg3: memref<1x32x8xbf16, #tpu.memory_space<vmem>>, %arg4: memref<1x1x8xf32, #tpu.memory_space<vmem>>, %arg5: memref<1x16x8xbf16, #tpu.memory_space<vmem>>) attributes {dimension_semantics = [#tpu.dimension_semantics<parallel>, #tpu.dimension_semantics<parallel>], iteration_bounds = array<i64: 1, 4>, scalar_prefetch = 0 : i64, scratch_operands = 0 : i64, tpu.core_type = #tpu.core_type<tc>, window_params = [{transform_indices = @transform_0, window_bounds = array<i64: 16, 32>}, {transform_indices = @transform_1, window_bounds = array<i64: 1, 32, 8>}, {transform_indices = @transform_2, window_bounds = array<i64: 1, 1, 8>}, {transform_indices = @transform_3, window_bounds = array<i64: 1, 16, 8>}]} {
    %c0 = arith.constant 0 : index
    %c0_0 = arith.constant 0 : index
    %0 = vector.load %arg2[%c0, %c0_0] : memref<16x32xbf16, #tpu.memory_space<vmem>>, vector<16x32xbf16>
    %c0_1 = arith.constant 0 : index
    %c0_2 = arith.constant 0 : index
    %c0_3 = arith.constant 0 : index
    %1 = vector.load %arg3[%c0_1, %c0_2, %c0_3] : memref<1x32x8xbf16, #tpu.memory_space<vmem>>, vector<1x32x8xbf16>
    %2 = vector.shape_cast %1 : vector<1x32x8xbf16> to vector<32x8xbf16>
    %cst = arith.constant dense<0.000000e+00> : vector<16x8xf32>
    %3 = tpu.matmul %0, %2, %cst {dimension_numbers = #tpu.dot_dimension_numbers<[1], [0], [0], [1], [0, 0, 1, 1], [], []>} : vector<16x32xbf16>, vector<32x8xbf16>, vector<16x8xf32> -> vector<16x8xf32>
    %c0_4 = arith.constant 0 : index
    %c0_5 = arith.constant 0 : index
    %c0_6 = arith.constant 0 : index
    %4 = vector.load %arg4[%c0_4, %c0_5, %c0_6] : memref<1x1x8xf32, #tpu.memory_space<vmem>>, vector<1x1x8xf32>
    %5 = vector.shape_cast %4 : vector<1x1x8xf32> to vector<1x8xf32>
    %6 = vector.broadcast %5 : vector<1x8xf32> to vector<16x8xf32>
    %7 = arith.addf %3, %6 : vector<16x8xf32>
    %8 = arith.truncf %7 : vector<16x8xf32> to vector<16x8xbf16>
    %c0_7 = arith.constant 0 : index
    %c0_8 = arith.constant 0 : index
    %c0_9 = arith.constant 0 : index
    %9 = vector.load %arg5[%c0_7, %c0_8, %c0_9] : memref<1x16x8xbf16, #tpu.memory_space<vmem>>, vector<1x16x8xbf16>
    %10 = vector.shape_cast %9 : vector<1x16x8xbf16> to vector<16x8xbf16>
    %11 = vector.shape_cast %8 : vector<16x8xbf16> to vector<1x16x8xbf16>
    tpu.vector_store %arg5[%c0_7, %c0_8, %c0_9], %11 {strides = array<i32>} : memref<1x16x8xbf16, #tpu.memory_space<vmem>>, vector<1x16x8xbf16>,
    return
  }
  func.func @transform_0(%arg0: i32, %arg1: i32) -> (i32, i32) {
    %c0_i32 = arith.constant 0 : i32
    %c0_i32_0 = arith.constant 0 : i32
    return %arg0, %c0_i32 : i32, i32
  }
  func.func @transform_1(%arg0: i32, %arg1: i32) -> (i32, i32, i32) {
    %c0_i32 = arith.constant 0 : i32
    %c0_i32_0 = arith.constant 0 : i32
    %c0_i32_1 = arith.constant 0 : i32
    return %arg1, %c0_i32, %c0_i32_0 : i32, i32, i32
  }
  func.func @transform_2(%arg0: i32, %arg1: i32) -> (i32, i32, i32) {
    %c0_i32 = arith.constant 0 : i32
    %c0_i32_0 = arith.constant 0 : i32
    %c0_i32_1 = arith.constant 0 : i32
    return %arg1, %c0_i32, %c0_i32_0 : i32, i32, i32
  }
  func.func @transform_3(%arg0: i32, %arg1: i32) -> (i32, i32, i32) {
    %c0_i32 = arith.constant 0 : i32
    %c0_i32_0 = arith.constant 0 : i32
    return %arg1, %arg0, %c0_i32 : i32, i32, i32
  }
}

</mosaic_0001>

<llo_original>
// kernel: tpu_custom_call.1
$region0: #{tpu_custom_call.1}
  #allocation0 [shape = 'u32[]', space=smem, size = 0x4, offset = 0x4, fixed_abs, tag = 'smem constant byte address 0x4 - core index']
  #allocation1 [shape = 'u32[144,128]{1,0:T(1,128)}', space=vmem, size = 0x12000, scoped, tag = 'internal scratch']
  %s0 = inlined_call_operand.hbm [shape: bf16[16,32], index: 0, kind: input, shape index: {}]
  %s1 = inlined_call_operand.hbm [shape: bf16[4,32,8], index: 1, kind: input, shape index: {}]
  %s2 = inlined_call_operand.hbm [shape: f32[4,1,8], index: 2, kind: input, shape index: {}]
  %s3 = inlined_call_operand.hbm [shape: bf16[4,16,8], index: 3, kind: output, shape index: {}]
  %s4 = sld [smem:[#allocation0]]
  $region57: #{tpu_custom_call.1} parent=0
    _
  %s6 = ssub.s32 1, %s4
  %s7 = scalar_select 0, %s6, %s4
  $region1: #{tpu_custom_call.1} parent=0
    #allocation2 [shape = 'u8[4096]{0}', space=vmem, size = 0x1000, scoped, tag = 'input window, operand 0, single buffered']
    #allocation3 [shape = 's32[2]{0}', space=sflag, size = 0x8, scoped, tag = 'scoped memory for tpu_custom_call.1']
    #allocation4 [shape = 's32[2]{0}', space=sflag, size = 0x8, scoped, tag = 'scoped memory for tpu_custom_call.1']
    #allocation5 [shape = 'u8[16384]{0}', space=vmem, size = 0x4000, scoped, tag = 'input window, operand 1']
    #allocation6 [shape = 's32[2]{0}', space=sflag, size = 0x8, scoped, tag = 'scoped memory for tpu_custom_call.1']
    #allocation7 [shape = 'u8[1024]{0}', space=vmem, size = 0x400, scoped, tag = 'input window, operand 2']
    #allocation8 [shape = 'u8[8192]{0}', space=vmem, size = 0x2000, scoped, tag = 'output window, operand 0']
    %8 = vsyncpa [#allocation3], 0
    %9 = vsyncpa [#allocation6], 0
    %s10 = scalar_lea.sflag [#allocation6], 1
    %11 = vsyncpa %s10, 0
    %12 = vsyncpa [#allocation4], 0
    %s13 = scalar_lea.sflag [#allocation4], 1
    %14 = vsyncpa %s13, 0
    loop: start=0, step=1, limit=6
    $region2: #{tpu_custom_call.1} parent=1 // loop_pre_header
      _
    $region3: #{tpu_custom_call.1} parent=1 // loop_header
      %s16 = sphi 0, %s20
      %p17 = scmp.ge.s32.totalorder %s16, 6
      %s23 = sphi 0, %s35
      %s24 = sphi 0, %s31
      %s25 = sphi 0, %s23
      %s26 = sphi 0, %s24
      %s27 = sphi 0, %s25
      %s28 = sphi 0, %s26
      %s38 = sphi 0, %s40
      %s41 = sphi 0, %s38
      %s42 = sphi 0, %s41
      %s58 = sphi 0, %s42
      %s64 = sphi 0, %s66
      %s67 = sphi 0, %s64
      %s68 = sphi 0, %s67
      %s84 = sphi 0, %s68
      %s90 = sphi 0, %s92
      %s93 = sphi 0, %s90
      %s94 = sphi 0, %s93
      %s110 = sphi 0, %s94
      %s118 = sphi 0, %s120
      %s121 = sphi 0, %s118
      %s122 = sphi 0, %s121
      %s138 = sphi 0, %s122
    $region4: #{tpu_custom_call.1} parent=1 // loop_header_branch
      %19 = sbr.rel (%p17) target = $region8
    $region5: #{tpu_custom_call.1} parent=1 // loop_body
      %s21 = ssub.s32 %s16, 1
      %s22 = ssub.s32 %s16, 2
      %s29 = sadd.s32 1, %s24
      %p30 = scmp.ge.s32.totalorder %s29, 4
      %s31 = scalar_select %p30, 0, %s29
      %s32 = sadd.s32 1, %s23
      %s33 = scalar_select %p30, %s32, %s23
      %p34 = scmp.ge.s32.totalorder %s33, 1
      %s35 = scalar_select %p34, 0, %s33
      %s36 = ssub.s32 %s23, %s35
      %p37 = scmp.eq.s32.totalorder %s36, 0
      %s39 = sadd.s32 %s38, 1
      %s40 = scalar_select %p37, %s38, %s39
      %p43 = pneg %p37
      %p44 = scmp.eq.s32.totalorder %s16, 3
      %p45 = por %p43, %p44
      %p46 = scmp.ne.s32.totalorder %s38, %s41
      %p47 = scmp.eq.s32.totalorder %s16, 0
      %p48 = por %p46, %p47
      %p49 = scmp.ne.s32.totalorder %s38, %s41
      %p50 = scmp.eq.s32.totalorder %s21, 3
      %p51 = por %p49, %p50
      %p52 = scmp.ne.s32.totalorder %s41, %s42
      %p53 = scmp.eq.s32.totalorder %s21, 0
      %p54 = por %p52, %p53
      %p55 = scmp.ne.s32.totalorder %s41, %s42
      %p56 = scmp.eq.s32.totalorder %s22, 3
      %p57 = por %p55, %p56
      %p59 = scmp.ne.s32.totalorder %s42, %s58
      %p60 = scmp.eq.s32.totalorder %s22, 0
      %p61 = por %p59, %p60
      %s62 = ssub.s32 %s24, %s31
      %p63 = scmp.eq.s32.totalorder %s62, 0
      %s65 = sadd.s32 %s64, 1
      %s66 = scalar_select %p63, %s64, %s65
      %p69 = pneg %p63
      %p70 = scmp.eq.s32.totalorder %s16, 3
      %p71 = por %p69, %p70
      %p72 = scmp.ne.s32.totalorder %s64, %s67
      %p73 = scmp.eq.s32.totalorder %s16, 0
      %p74 = por %p72, %p73
      %p75 = scmp.ne.s32.totalorder %s64, %s67
      %p76 = scmp.eq.s32.totalorder %s21, 3
      %p77 = por %p75, %p76
      %p78 = scmp.ne.s32.totalorder %s67, %s68
      %p79 = scmp.eq.s32.totalorder %s21, 0
      %p80 = por %p78, %p79
      %p81 = scmp.ne.s32.totalorder %s67, %s68
      %p82 = scmp.eq.s32.totalorder %s22, 3
      %p83 = por %p81, %p82
      %p85 = scmp.ne.s32.totalorder %s68, %s84
      %p86 = scmp.eq.s32.totalorder %s22, 0
      %p87 = por %p85, %p86
      %s88 = ssub.s32 %s24, %s31
      %p89 = scmp.eq.s32.totalorder %s88, 0
      %s91 = sadd.s32 %s90, 1
      %s92 = scalar_select %p89, %s90, %s91
      %p95 = pneg %p89
      %p96 = scmp.eq.s32.totalorder %s16, 3
      %p97 = por %p95, %p96
      %p98 = scmp.ne.s32.totalorder %s90, %s93
      %p99 = scmp.eq.s32.totalorder %s16, 0
      %p100 = por %p98, %p99
      %p101 = scmp.ne.s32.totalorder %s90, %s93
      %p102 = scmp.eq.s32.totalorder %s21, 3
      %p103 = por %p101, %p102
      %p104 = scmp.ne.s32.totalorder %s93, %s94
      %p105 = scmp.eq.s32.totalorder %s21, 0
      %p106 = por %p104, %p105
      %p107 = scmp.ne.s32.totalorder %s93, %s94
      %p108 = scmp.eq.s32.totalorder %s22, 3
      %p109 = por %p107, %p108
      %p111 = scmp.ne.s32.totalorder %s94, %s110
      %p112 = scmp.eq.s32.totalorder %s22, 0
      %p113 = por %p111, %p112
      %s114 = ssub.s32 %s24, %s31
      %s115 = ssub.s32 %s23, %s35
      %s116 = sor.u32 %s114, %s115
      %p117 = scmp.eq.s32.totalorder %s116, 0
      %s119 = sadd.s32 %s118, 1
      %s120 = scalar_select %p117, %s118, %s119
      %p123 = pneg %p117
      %p124 = scmp.eq.s32.totalorder %s16, 3
      %p125 = por %p123, %p124
      %p126 = scmp.ne.s32.totalorder %s118, %s121
      %p127 = scmp.eq.s32.totalorder %s16, 0
      %p128 = por %p126, %p127
      %p129 = scmp.ne.s32.totalorder %s118, %s121
      %p130 = scmp.eq.s32.totalorder %s21, 3
      %p131 = por %p129, %p130
      %p132 = scmp.ne.s32.totalorder %s121, %s122
      %p133 = scmp.eq.s32.totalorder %s21, 0
      %p134 = por %p132, %p133
      %p135 = scmp.ne.s32.totalorder %s121, %s122
      %p136 = scmp.eq.s32.totalorder %s22, 3
      %p137 = por %p135, %p136
      %p139 = scmp.ne.s32.totalorder %s122, %s138
      %p140 = scmp.eq.s32.totalorder %s22, 0
      %p141 = por %p139, %p140
      %p142 = scmp.le.s32.totalorder 1, %s16
      %p143 = scmp.lt.s32.totalorder %s16, 5
      %p144 = pnand %p142, %p143
      %p145 = pneg %p144
      // Predicated region
      $region9: #{tpu_custom_call.1} parent=5 // pred_check
        _
      $region10: #{tpu_custom_call.1} parent=5 // pred_check_branch
        %147 = sbr.rel (%p144) target = $region12
      $region11: #{tpu_custom_call.1} parent=5 // pred_region
        %s148 = ssub.s32 %s16, 1
        // Predicated region
        $region13: #{tpu_custom_call.1} parent=11 // pred_check
          %p149 = pneg %p54
        $region14: #{tpu_custom_call.1} parent=11 // pred_check_branch
          %151 = sbr.rel (%p149) target = $region16
        $region15: #{tpu_custom_call.1} parent=11 // pred_region
          %s152 = smul.u32 2, %s25
          %s154 = ssub.s32 128, 128
          %155 = vsyncadd [#allocation3], %s154
          %s156 = smul.addr %s152, 64
          %s157 = scalar_lea.hbm %s0, %s156
          %s158 = sshll.u32 [#allocation2], 4
          %s159 = int_to_ptr.vmem [resolvable:$true] %s158
          %164 = dma.hbm_to_vmem [thread:$0]  %s157, 128, %s159, [#allocation3], 64, 64, 4
        $region16: #{tpu_custom_call.1} parent=11 // pred_fallthru
          _
      $region12: #{tpu_custom_call.1} parent=5 // pred_fallthru
        _
      %p165 = scmp.lt.s32.totalorder %s16, 4
      // Predicated region
      $region17: #{tpu_custom_call.1} parent=5 // pred_check
        %p166 = pneg %p165
      $region18: #{tpu_custom_call.1} parent=5 // pred_check_branch
        %168 = sbr.rel (%p166) target = $region20
      $region19: #{tpu_custom_call.1} parent=5 // pred_region
        // Predicated region
        $region21: #{tpu_custom_call.1} parent=19 // pred_check
          %p169 = pneg %p74
        $region22: #{tpu_custom_call.1} parent=19 // pred_check_branch
          %171 = sbr.rel (%p169) target = $region24
        $region23: #{tpu_custom_call.1} parent=19 // pred_region
          %s172 = sand.u32 %s16, 1
          %s173 = scalar_lea.sflag [#allocation6], %s172
          %s174 = sand.u32 %s64, 1
          %s175 = smul.addr %s174, 16
          %s176 = scalar_lea.vmem [#allocation5], %s175
          %s178 = ssub.s32 256, 256
          %179 = vsyncadd %s173, %s178
          %s180 = smul.addr %s24, 4
          %s181 = smul.addr %s180, 64
          %s182 = scalar_lea.hbm %s1, %s181
          %s183 = sshll.u32 %s176, 4
          %s184 = int_to_ptr.vmem [resolvable:$true] %s183
          %189 = dma.hbm_to_vmem [thread:$0]  %s182, 256, %s184, %s173, 64, 64, 4
        $region24: #{tpu_custom_call.1} parent=19 // pred_fallthru
          _
        // Predicated region
        $region25: #{tpu_custom_call.1} parent=19 // pred_check
          %p190 = pneg %p100
        $region26: #{tpu_custom_call.1} parent=19 // pred_check_branch
          %192 = sbr.rel (%p190) target = $region28
        $region27: #{tpu_custom_call.1} parent=19 // pred_region
          %s193 = sand.u32 %s16, 1
          %s194 = scalar_lea.sflag [#allocation6], %s193
          %s195 = sand.u32 %s90, 1
          %s196 = scalar_lea.vmem [#allocation7], %s195
          %s198 = ssub.s32 16, 16
          %199 = vsyncadd %s194, %s198
          %s200 = smul.addr %s24, 16
          %s201 = scalar_lea.hbm %s2, %s200
          %s203 = sshll.u32 %s196, 4
          %s204 = int_to_ptr.vmem [resolvable:$true] %s203
          %206 = dma.hbm_to_vmem [thread:$0]  %s201, 16, %s204, %s194
        $region28: #{tpu_custom_call.1} parent=19 // pred_fallthru
          _
      $region20: #{tpu_custom_call.1} parent=5 // pred_fallthru
        _
      %p207 = scmp.le.s32.totalorder 1, %s16
      %p208 = scmp.lt.s32.totalorder %s16, 5
      %p209 = pnand %p207, %p208
      %p210 = pneg %p209
      // Predicated region
      $region29: #{tpu_custom_call.1} parent=5 // pred_check
        _
      $region30: #{tpu_custom_call.1} parent=5 // pred_check_branch
        %212 = sbr.rel (%p209) target = $region32
      $region31: #{tpu_custom_call.1} parent=5 // pred_region
        %s213 = ssub.s32 %s16, 1
        // Predicated region
        $region33: #{tpu_custom_call.1} parent=31 // pred_check
          %p214 = pneg %p54
        $region34: #{tpu_custom_call.1} parent=31 // pred_check_branch
          %216 = sbr.rel (%p214) target = $region36
        $region35: #{tpu_custom_call.1} parent=31 // pred_region
          %217 = dma.done [#allocation3], 128
        $region36: #{tpu_custom_call.1} parent=31 // pred_fallthru
          _
        %s218 = sand.u32 %s21, 1
        %s219 = scalar_lea.sflag [#allocation6], %s218
        %s220 = sand.u32 %s67, 1
        %s221 = smul.addr %s220, 16
        %s222 = scalar_lea.vmem [#allocation5], %s221
        // Predicated region
        $region37: #{tpu_custom_call.1} parent=31 // pred_check
          %p223 = pneg %p80
        $region38: #{tpu_custom_call.1} parent=31 // pred_check_branch
          %225 = sbr.rel (%p223) target = $region40
        $region39: #{tpu_custom_call.1} parent=31 // pred_region
          %226 = dma.done %s219, 256
        $region40: #{tpu_custom_call.1} parent=31 // pred_fallthru
          _
        %s227 = sand.u32 %s21, 1
        %s228 = scalar_lea.sflag [#allocation6], %s227
        %s229 = sand.u32 %s93, 1
        %s230 = scalar_lea.vmem [#allocation7], %s229
        // Predicated region
        $region41: #{tpu_custom_call.1} parent=31 // pred_check
          %p231 = pneg %p106
        $region42: #{tpu_custom_call.1} parent=31 // pred_check_branch
          %233 = sbr.rel (%p231) target = $region44
        $region43: #{tpu_custom_call.1} parent=31 // pred_region
          %234 = dma.done %s228, 16
        $region44: #{tpu_custom_call.1} parent=31 // pred_fallthru
          _
        %p235 = pneg %p54
        %p236 = pneg %p51
        %s237 = sand.u32 %s21, 1
        %s238 = scalar_lea.sflag [#allocation6], %s237
        %s239 = sand.u32 %s67, 1
        %s240 = smul.addr %s239, 16
        %s241 = scalar_lea.vmem [#allocation5], %s240
        %p242 = pneg %p80
        %p243 = pneg %p77
        %s244 = sand.u32 %s21, 1
        %s245 = scalar_lea.sflag [#allocation6], %s244
        %s246 = sand.u32 %s93, 1
        %s247 = scalar_lea.vmem [#allocation7], %s246
        %p248 = pneg %p106
        %p249 = pneg %p103
        %p250 = pneg %p134
        %p251 = pneg %p131
        %s252 = sand.u32 %s121, 1
        %s253 = scalar_lea.sflag [#allocation4], %s252
        %s254 = sand.u32 %s121, 1
        %s255 = smul.addr %s254, 8
        %s256 = scalar_lea.vmem [#allocation8], %s255
        %s257 = smul.u32 2, %s25
        %s258 = smul.u32 2, %s25
        %v260 = vld [vmem:[#allocation2] sm:$0xf]
        %v261 = vld [vmem:[#allocation2 + $0x4] sm:$0xf]
        %v262 = vld [vmem:[%s222] sm:$0xf]
        %v263 = vld [vmem:[%s222 + $0x4] sm:$0xf]
        %v264 = vld [vmem:[%s222 + $0x8] sm:$0xf]
        %v265 = vld [vmem:[%s222 + $0xc] sm:$0xf]
        %v266 = vld [vmem:[%s230] sm:$0x1]
        %v268 = vlaneseq
        %v269 = vshrl.u32 %v268, 7
        %v270 = vsub.s32 0, %v269
        %v271 = vrot.slane %v266, %v270
        %v275 = vunpack.c.l.b16 %v260
        %v276 = vunpack.c.l.b16 %v261
        %v277 = vpack.c.b16 %v276, %v275
        %v282 = vunpack.c.l.b16 %v262
        %v283 = vunpack.c.l.b16 %v263
        %v284 = vunpack.c.l.b16 %v264
        %v285 = vunpack.c.l.b16 %v265
        %v286 = vpack.c.b16 %v283, %v282
        %v287 = vpack.c.b16 %v285, %v284
        %vm290 = vcmask 261120
        %v292 = vsel %vm290, %v277, 0
        %294 = vmatprep.subr.bf16.mxu0 0
        %295 = vmatpush1.bf16.msra.mxu0 %v286
        %296 = vmatprep.subr.bf16.mxu0 0
        %297 = vmatpush1.bf16.msra.mxu0 %v287
        %298 = vmatprep.subr.bf16.mxu0 0
        %299 = vmatpush1.bf16.msra.mxu0 0
        %300 = vmatprep.subr.bf16.mxu0 0
        %301 = vmatpush1.bf16.msra.mxu0 0
        %302 = vmatprep.subr.bf16.mxu0 0
        %303 = vmatpush1.bf16.msra.mxu0 0
        %304 = vmatprep.subr.bf16.mxu0 0
        %305 = vmatpush1.bf16.msra.mxu0 0
        %306 = vmatprep.subr.bf16.mxu0 0
        %307 = vmatpush1.bf16.msra.mxu0 0
        %308 = vmatprep.subr.bf16.mxu0 0
        %309 = vmatpush1.bf16.msra.mxu0 0
        %310 = vmatprep.subr.bf16.mxu0 0
        %311 = vmatpush1.bf16.msra.mxu0 0
        %312 = vmatprep.subr.bf16.mxu0 0
        %313 = vmatpush1.bf16.msra.mxu0 0
        %314 = vmatprep.subr.bf16.mxu0 0
        %315 = vmatpush1.bf16.msra.mxu0 0
        %316 = vmatprep.subr.bf16.mxu0 0
        %317 = vmatpush1.bf16.msra.mxu0 0
        %318 = vmatprep.subr.bf16.mxu0 0
        %319 = vmatpush1.bf16.msra.mxu0 0
        %320 = vmatprep.subr.bf16.mxu0 0
        %321 = vmatpush1.bf16.msra.mxu0 0
        %322 = vmatprep.subr.bf16.mxu0 0
        %323 = vmatpush1.bf16.msra.mxu0 0
        %324 = vmatprep.subr.bf16.mxu0 0
        %325 = vmatpush1.bf16.msra.mxu0 0
        %326 = vmatprep.mubr.bf16.mxu0 0
        %327 = vmatmul.mubr.bf16.gmra.mrb[0].mxu0 %v292
        %v328 = vpop.f32.mrb[0].mxu0
        %v329 = vadd.f32 %v271, %v328
        %v330 = vpop.f32.mrb[0].mxu0
        %v331 = vpop.f32.mrb[0].mxu0
        %v332 = vadd.f32 %v271, %v331
        %v333 = vpop.f32.mrb[0].mxu0
        %334 = vdwg.mxu0
        %v335 = vpack.c.bf16 %v332, %v329
        %v337 = vunpack.c.l.b16 %v335
        %v338 = vunpack.c.h.b16 %v335
        %v339 = vpack.c.b16 %v337, %v337
        %v340 = vpack.c.b16 %v338, %v338
        %vm343 = vcmask 60416
        %344 = vst.msk [vmem:[%s256] sm:$0xf] %vm343, %v339
        %345 = vst.msk [vmem:[%s256 + $0x4] sm:$0xf] %vm343, %v340
        %s346 = sand.u32 %s121, 1
        %s347 = scalar_lea.sflag [#allocation4], %s346
        %s348 = sand.u32 %s121, 1
        %s349 = smul.addr %s348, 8
        %s350 = scalar_lea.vmem [#allocation8], %s349
        // Predicated region
        $region45: #{tpu_custom_call.1} parent=31 // pred_check
          %p351 = pneg %p131
        $region46: #{tpu_custom_call.1} parent=31 // pred_check_branch
          %353 = sbr.rel (%p351) target = $region48
        $region47: #{tpu_custom_call.1} parent=31 // pred_region
          %s354 = smul.u32 2, %s25
          %s356 = ssub.s32 128, 128
          %357 = vsyncadd %s347, %s356
          %s358 = smul.addr %s26, 2
          %s359 = sadd.s32 %s354, %s358
          %s360 = smul.addr %s359, 64
          %s361 = scalar_lea.hbm %s3, %s360
          %s362 = sshll.u32 %s350, 4
          %s363 = int_to_ptr.vmem [resolvable:$true] %s362
          %368 = dma.vmem_to_hbm [thread:$0]  %s363, 128, %s361, %s347, 64, 64, 4
        $region48: #{tpu_custom_call.1} parent=31 // pred_fallthru
          _
      $region32: #{tpu_custom_call.1} parent=5 // pred_fallthru
        _
      %p369 = scmp.le.s32.totalorder 2, %s16
      // Predicated region
      $region49: #{tpu_custom_call.1} parent=5 // pred_check
        %p370 = pneg %p369
      $region50: #{tpu_custom_call.1} parent=5 // pred_check_branch
        %372 = sbr.rel (%p370) target = $region52
      $region51: #{tpu_custom_call.1} parent=5 // pred_region
        %s373 = ssub.s32 %s16, 2
        // Predicated region
        $region53: #{tpu_custom_call.1} parent=51 // pred_check
          %p374 = pneg %p137
        $region54: #{tpu_custom_call.1} parent=51 // pred_check_branch
          %376 = sbr.rel (%p374) target = $region56
        $region55: #{tpu_custom_call.1} parent=51 // pred_region
          %s377 = sand.u32 %s122, 1
          %s378 = scalar_lea.sflag [#allocation4], %s377
          %s379 = sand.u32 %s122, 1
          %s380 = smul.addr %s379, 8
          %s381 = scalar_lea.vmem [#allocation8], %s380
          %382 = dma.done %s378, 128
        $region56: #{tpu_custom_call.1} parent=51 // pred_fallthru
          _
      $region52: #{tpu_custom_call.1} parent=5 // pred_fallthru
        _
    $region6: #{tpu_custom_call.1} parent=1 // loop_footer
      %s20 = sadd.s32 1, %s16
    $region7: #{tpu_custom_call.1} parent=1 // loop_footer_branch
      %15 = sbr.rel target = $region3
    $region8: #{tpu_custom_call.1} parent=1 // loop_exit
      _
    %383 = vsyncpa [#allocation3], 1
    %s384 = scalar_lea.sflag [#allocation3], 1
    %385 = vsyncpa %s384, 1
    %386 = vsyncpa [#allocation6], 1
    %s387 = scalar_lea.sflag [#allocation6], 1
    %388 = vsyncpa %s387, 1
    %389 = vsyncpa [#allocation4], 1
    %s390 = scalar_lea.sflag [#allocation4], 1
    %391 = vsyncpa %s390, 1

</llo_original>
